<compile_context>
chip_gen: v6e
topology: v6e:2x2x1
jax: 0.10.0
libtpu: 0.0.40
codegen_flags: <defaults>
</compile_context>

<pallas_src>
import functools

import numpy as np
import jax
import jax.numpy as jnp
from jax.experimental import pallas as pl
from jax.experimental.pallas import tpu as pltpu


# --------------------------- host-side (cached) constants --------------------

def _bilinear_resize_matrix(n_in, n_out):
    """1-D interpolation matrix R (n_out, n_in), PyTorch bilinear, align_corners=False."""
    # TODO(synk): ez_torch's `.ez.resize` interpolation mode is assumed to be
    # F.interpolate(mode='bilinear', align_corners=False).
    scale = n_in / n_out
    i = np.arange(n_out, dtype=np.float64)
    src = (i + 0.5) * scale - 0.5
    src = np.maximum(src, 0.0)
    i0 = np.minimum(np.floor(src).astype(np.int64), n_in - 1)
    i1 = np.minimum(i0 + 1, n_in - 1)
    frac = src - i0
    r = np.zeros((n_out, n_in), np.float32)
    r[np.arange(n_out), i0] += (1.0 - frac).astype(np.float32)
    r[np.arange(n_out), i1] += frac.astype(np.float32)
    return r


@functools.lru_cache(maxsize=None)
def _resize_kron_blockdiag(uv_h, uv_w, h, w):
    """Block-diag [kron(Rh,Rw).T, kron(Rh,Rw).T] so both offset channels are
    resized with one lane-dense matmul: (1, 2*UVP) @ (2*UVP, 2*H*W)."""
    rh = _bilinear_resize_matrix(uv_h, h)          # (H, uv_h)
    rw = _bilinear_resize_matrix(uv_w, w)          # (W, uv_w)
    m = np.kron(rh, rw)                            # (H*W, uv_h*uv_w)
    uvp, p = uv_h * uv_w, h * w
    mt2 = np.zeros((2 * uvp, 2 * p), np.float32)
    mt2[:uvp, :p] = m.T
    mt2[uvp:, p:] = m.T
    return mt2


@functools.lru_cache(maxsize=None)
def _get_uv_grid_np(uv_h, uv_w):
    """Identity sampling grid (2, uv_h, uv_w): channel 0 = x in [-1,1] along width,
    channel 1 = y in [-1,1] along height."""
    # TODO(synk): exact get_uv_grid convention from ez_torch assumed (identity grid).
    xs = np.linspace(-1.0, 1.0, uv_w, dtype=np.float32)
    ys = np.linspace(-1.0, 1.0, uv_h, dtype=np.float32)
    gx = np.broadcast_to(xs[None, :], (uv_h, uv_w))
    gy = np.broadcast_to(ys[:, None], (uv_h, uv_w))
    return np.stack([gx, gy], axis=0)


def _get_uv_grid(uv_h, uv_w):
    return _get_uv_grid_np(uv_h, uv_w)


# ------------------------------ fused kernel ----------------------------------
# Per grid step (one batch element):
#   1) offset = tanh(x @ (0.5*W)^T + 0.5*b) + id_uv            (== sigmoid*2-1)
#   2) grid   = offset @ blockdiag(kron(Rh,Rw).T)              (bilinear resize)
#   3) out    = clamp(img @ sampling_matrix(grid), 0, 1)       (grid_sample)

def _fused_kernel(x_ref, wt_ref, aux_ref, mt_ref, img_ref, o_ref, *, h, w):
    p = h * w

    # ---- 1) offset head (MXU matmul + EUP tanh) ----
    z = jnp.dot(x_ref[0], wt_ref[...], preferred_element_type=jnp.float32)    # (1, 2*UVP)
    off = jnp.tanh(z + aux_ref[0:1, :]) + aux_ref[1:2, :]                     # (1, 2*UVP)

    # ---- 2) bilinear resize of both channels, one lane-dense matmul ----
    grid_xy = jnp.dot(off, mt_ref[...], preferred_element_type=jnp.float32)   # (1, 2*P)
    gx = grid_xy[:, :p]        # (1, P)  x in [-1,1], indexes width
    gy = grid_xy[:, p:]        # (1, P)  y in [-1,1], indexes height

    # ---- 3) grid_sample: bilinear, align_corners=True, padding_mode='zeros' ----
    ix = (gx + 1.0) * (0.5 * (w - 1))
    iy = (gy + 1.0) * (0.5 * (h - 1))
    ix0f = jnp.floor(ix)
    iy0f = jnp.floor(iy)
    wx1 = ix - ix0f
    wy1 = iy - iy0f
    ix0 = ix0f.astype(jnp.int32)
    iy0 = iy0f.astype(jnp.int32)

    # Separable per-row / per-column sampling weights on SMALL maps.
    # Out-of-bounds corner indices never match the iota -> contribute zero,
    # which is exactly padding_mode='zeros' (no clips / validity masks needed).
    h_iota = jax.lax.broadcasted_iota(jnp.int32, (h, p), 0)                   # (H, P)
    w_iota = jax.lax.broadcasted_iota(jnp.int32, (w, p), 0)                   # (W, P)
    wy_full = (jnp.where(h_iota == iy0, 1.0 - wy1, 0.0)
               + jnp.where(h_iota == iy0 + 1, wy1, 0.0))                      # (H, P)
    wx_full = (jnp.where(w_iota == ix0, 1.0 - wx1, 0.0)
               + jnp.where(w_iota == ix0 + 1, wx1, 0.0))                      # (W, P)

    # Sampling matrix as an outer product over (h, w): one (Q,P)-sized multiply.
    st = (wy_full.reshape(h, 1, p) * wx_full.reshape(1, w, p)).reshape(p, p)  # (Q, P)

    # bf16 MXU matmul (weights in [0,1], image in [0,1]) with f32 accumulate.
    out = jnp.dot(img_ref[0].astype(jnp.bfloat16), st.astype(jnp.bfloat16),
                  preferred_element_type=jnp.float32)                         # (C, P)
    o_ref[0] = jnp.clip(out, 0.0, 1.0)


# ------------------------------- full forward --------------------------------

@functools.partial(jax.jit, static_argnames=("uv_shape",))
def spatial_uv_offset_transformer(inp, tensor_3d, w, bias, id_uv, *, uv_shape):
    b, din = inp.shape
    c, h, wid = tensor_3d.shape[1], tensor_3d.shape[2], tensor_3d.shape[3]
    uv_h, uv_w = uv_shape
    uvp = uv_h * uv_w
    out_dim = 2 * uvp
    p = h * wid

    # Fold sigmoid(z)*2-1 == tanh(z/2) into the linear layer (host-side scale).
    wt_half = jnp.transpose(0.5 * w.astype(jnp.float32))                      # (Din, 2*UVP)
    aux = jnp.stack([0.5 * bias.astype(jnp.float32),
                     id_uv.astype(jnp.float32).reshape(-1)], axis=0)          # (2, 2*UVP)
    mt2 = jnp.asarray(_resize_kron_blockdiag(uv_h, uv_w, h, wid))             # (2*UVP, 2*P)

    x3 = inp.astype(jnp.float32).reshape(b, 1, din)                           # (B, 1, Din)
    img_flat = tensor_3d.astype(jnp.float32).reshape(b, c, p)                 # (B, C, H*W) lane-dense

    out_flat = pl.pallas_call(
        functools.partial(_fused_kernel, h=h, w=wid),
        out_shape=jax.ShapeDtypeStruct((b, c, p), jnp.float32),
        grid=(b,),
        in_specs=[
            pl.BlockSpec((1, 1, din), lambda i: (i, 0, 0)),       # input row
            pl.BlockSpec((din, out_dim), lambda i: (0, 0)),       # 0.5*W^T
            pl.BlockSpec((2, out_dim), lambda i: (0, 0)),         # [0.5*bias; id_uv]
            pl.BlockSpec((2 * uvp, 2 * p), lambda i: (0, 0)),     # block-diag kron resize
            pl.BlockSpec((1, c, p), lambda i: (i, 0, 0)),         # image (flattened)
        ],
        out_specs=pl.BlockSpec((1, c, p), lambda i: (i, 0, 0)),
        compiler_params=pltpu.CompilerParams(
            dimension_semantics=("parallel",)),                   # batch across TCs on v7x
    )(x3, wt_half, aux, mt2, img_flat)

    return out_flat.reshape(b, c, h, wid)


# ----------------------------------- main -------------------------------------

if __name__ == "__main__":
    B, Din = 2, 32
    C, H, W = 4, 16, 16
    UV_SHAPE = (8, 8)
    WEIGHT_MULT_FACTOR = 0.5

    key = jax.random.PRNGKey(0)
    k_w, k_inp, k_img = jax.random.split(key, 3)

    out_dim = int(np.prod(UV_SHAPE)) * 2
    # nn.Linear default init: U(-1/sqrt(in), 1/sqrt(in)), then *= weight_mult_factor
    bound = 1.0 / np.sqrt(Din)
    w = jax.random.uniform(k_w, (out_dim, Din), jnp.float32, -bound, bound) * WEIGHT_MULT_FACTOR
    bias = jnp.zeros((out_dim,), jnp.float32)                # bias.data.fill_(0)
    id_uv = jnp.asarray(_get_uv_grid(*UV_SHAPE))             # (2, uv_h, uv_w), frozen param

    inp = jax.random.normal(k_inp, (B, Din), jnp.float32)
    tensor_3d = jax.random.uniform(k_img, (B, C, H, W), jnp.float32)

    out = spatial_uv_offset_transformer(inp, tensor_3d, w, bias, id_uv, uv_shape=UV_SHAPE)
    out = jax.block_until_ready(out)

    assert out.shape == (B, C, H, W)
    assert bool(jnp.all(jnp.isfinite(out)))
    assert bool(jnp.all((out >= 0.0) & (out <= 1.0)))
    print("KERNEL_OK")
</pallas_src>

<mosaic_0001>
module attributes {stable_mosaic.version = 11 : i64} {
  func.func @_fused_kernel(%arg0: i32, %arg1: memref<1x1x32xf32, #tpu.memory_space<vmem>>, %arg2: memref<32x128xf32, #tpu.memory_space<vmem>>, %arg3: memref<2x128xf32, #tpu.memory_space<vmem>>, %arg4: memref<128x512xf32, #tpu.memory_space<vmem>>, %arg5: memref<1x4x256xf32, #tpu.memory_space<vmem>>, %arg6: memref<1x4x256xf32, #tpu.memory_space<vmem>>) attributes {dimension_semantics = [#tpu.dimension_semantics<parallel>], iteration_bounds = array<i64: 2>, scalar_prefetch = 0 : i64, scratch_operands = 0 : i64, tpu.core_type = #tpu.core_type<tc>, window_params = [{transform_indices = @transform_0, window_bounds = array<i64: 1, 1, 32>}, {pipeline_mode = #tpu.pipeline_mode<synchronous>, transform_indices = @transform_1, window_bounds = array<i64: 32, 128>}, {pipeline_mode = #tpu.pipeline_mode<synchronous>, transform_indices = @transform_2, window_bounds = array<i64: 2, 128>}, {pipeline_mode = #tpu.pipeline_mode<synchronous>, transform_indices = @transform_3, window_bounds = array<i64: 128, 512>}, {transform_indices = @transform_4, window_bounds = array<i64: 1, 4, 256>}, {transform_indices = @transform_5, window_bounds = array<i64: 1, 4, 256>}]} {
    %c0 = arith.constant 0 : index
    %c0_0 = arith.constant 0 : index
    %c0_1 = arith.constant 0 : index
    %0 = vector.load %arg1[%c0, %c0_0, %c0_1] : memref<1x1x32xf32, #tpu.memory_space<vmem>>, vector<1x1x32xf32>
    %1 = vector.shape_cast %0 : vector<1x1x32xf32> to vector<1x32xf32>
    %c0_2 = arith.constant 0 : index
    %c0_3 = arith.constant 0 : index
    %2 = vector.load %arg2[%c0_2, %c0_3] : memref<32x128xf32, #tpu.memory_space<vmem>>, vector<32x128xf32>
    %cst = arith.constant dense<0.000000e+00> : vector<1x128xf32>
    %3 = tpu.matmul %1, %2, %cst {dimension_numbers = #tpu.dot_dimension_numbers<[1], [0], [0], [1], [0, 0, 1, 1], [], []>} : vector<1x32xf32>, vector<32x128xf32>, vector<1x128xf32> -> vector<1x128xf32>
    %c0_4 = arith.constant 0 : index
    %c0_5 = arith.constant 0 : index
    %4 = vector.load %arg3[%c0_4, %c0_5] : memref<2x128xf32, #tpu.memory_space<vmem>>, vector<1x128xf32>
    %5 = arith.addf %3, %4 : vector<1x128xf32>
    %6 = math.tanh %5 : vector<1x128xf32>
    %c1 = arith.constant 1 : index
    %c0_6 = arith.constant 0 : index
    %7 = vector.load %arg3[%c1, %c0_6] : memref<2x128xf32, #tpu.memory_space<vmem>>, vector<1x128xf32>
    %8 = arith.addf %6, %7 : vector<1x128xf32>
    %c0_7 = arith.constant 0 : index
    %c0_8 = arith.constant 0 : index
    %9 = vector.load %arg4[%c0_7, %c0_8] : memref<128x512xf32, #tpu.memory_space<vmem>>, vector<128x512xf32>
    %cst_9 = arith.constant dense<0.000000e+00> : vector<1x512xf32>
    %10 = tpu.matmul %8, %9, %cst_9 {dimension_numbers = #tpu.dot_dimension_numbers<[1], [0], [0], [1], [0, 0, 1, 1], [], []>} : vector<1x128xf32>, vector<128x512xf32>, vector<1x512xf32> -> vector<1x512xf32>
    %11 = vector.extract_strided_slice %10 {offsets = [0, 0], sizes = [1, 256], strides = [1, 1]} : vector<1x512xf32> to vector<1x256xf32>
    %12 = vector.extract_strided_slice %10 {offsets = [0, 256], sizes = [1, 256], strides = [1, 1]} : vector<1x512xf32> to vector<1x256xf32>
    %cst_10 = arith.constant 1.000000e+00 : f32
    %13 = vector.broadcast %cst_10 : f32 to vector<1x256xf32>
    %14 = arith.addf %11, %13 : vector<1x256xf32>
    %cst_11 = arith.constant 7.500000e+00 : f32
    %15 = vector.broadcast %cst_11 : f32 to vector<1x256xf32>
    %16 = arith.mulf %14, %15 : vector<1x256xf32>
    %cst_12 = arith.constant 1.000000e+00 : f32
    %17 = vector.broadcast %cst_12 : f32 to vector<1x256xf32>
    %18 = arith.addf %12, %17 : vector<1x256xf32>
    %cst_13 = arith.constant 7.500000e+00 : f32
    %19 = vector.broadcast %cst_13 : f32 to vector<1x256xf32>
    %20 = arith.mulf %18, %19 : vector<1x256xf32>
    %21 = math.floor %16 : vector<1x256xf32>
    %22 = math.floor %20 : vector<1x256xf32>
    %23 = arith.subf %16, %21 : vector<1x256xf32>
    %24 = arith.subf %20, %22 : vector<1x256xf32>
    %25 = arith.fptosi %21 : vector<1x256xf32> to vector<1x256xi32>
    %26 = arith.fptosi %22 : vector<1x256xf32> to vector<1x256xi32>
    %27 = tpu.iota {dimensions = array<i32: 0>} : vector<16x256xi32>
    %28 = tpu.iota {dimensions = array<i32: 0>} : vector<16x256xi32>
    %29 = vector.broadcast %26 : vector<1x256xi32> to vector<16x256xi32>
    %30 = arith.cmpi eq, %27, %29 : vector<16x256xi32>
    %cst_14 = arith.constant 1.000000e+00 : f32
    %31 = vector.broadcast %cst_14 : f32 to vector<1x256xf32>
    %32 = arith.subf %31, %24 : vector<1x256xf32>
    %cst_15 = arith.constant 0.000000e+00 : f32
    %33 = vector.shape_cast %32 : vector<1x256xf32> to vector<1x256xf32>
    %34 = vector.broadcast %33 : vector<1x256xf32> to vector<16x256xf32>
    %35 = vector.broadcast %cst_15 : f32 to vector<16x256xf32>
    %36 = arith.select %30, %34, %35 : vector<16x256xi1>, vector<16x256xf32>
    %c1_i32 = arith.constant 1 : i32
    %37 = vector.broadcast %c1_i32 : i32 to vector<1x256xi32>
    %38 = arith.addi %26, %37 : vector<1x256xi32>
    %39 = vector.broadcast %38 : vector<1x256xi32> to vector<16x256xi32>
    %40 = arith.cmpi eq, %27, %39 : vector<16x256xi32>
    %cst_16 = arith.constant 0.000000e+00 : f32
    %41 = vector.shape_cast %24 : vector<1x256xf32> to vector<1x256xf32>
    %42 = vector.broadcast %41 : vector<1x256xf32> to vector<16x256xf32>
    %43 = vector.broadcast %cst_16 : f32 to vector<16x256xf32>
    %44 = arith.select %40, %42, %43 : vector<16x256xi1>, vector<16x256xf32>
    %45 = arith.addf %36, %44 : vector<16x256xf32>
    %46 = vector.broadcast %25 : vector<1x256xi32> to vector<16x256xi32>
    %47 = arith.cmpi eq, %28, %46 : vector<16x256xi32>
    %cst_17 = arith.constant 1.000000e+00 : f32
    %48 = vector.broadcast %cst_17 : f32 to vector<1x256xf32>
    %49 = arith.subf %48, %23 : vector<1x256xf32>
    %cst_18 = arith.constant 0.000000e+00 : f32
    %50 = vector.shape_cast %49 : vector<1x256xf32> to vector<1x256xf32>
    %51 = vector.broadcast %50 : vector<1x256xf32> to vector<16x256xf32>
    %52 = vector.broadcast %cst_18 : f32 to vector<16x256xf32>
    %53 = arith.select %47, %51, %52 : vector<16x256xi1>, vector<16x256xf32>
    %c1_i32_19 = arith.constant 1 : i32
    %54 = vector.broadcast %c1_i32_19 : i32 to vector<1x256xi32>
    %55 = arith.addi %25, %54 : vector<1x256xi32>
    %56 = vector.broadcast %55 : vector<1x256xi32> to vector<16x256xi32>
    %57 = arith.cmpi eq, %28, %56 : vector<16x256xi32>
    %cst_20 = arith.constant 0.000000e+00 : f32
    %58 = vector.shape_cast %23 : vector<1x256xf32> to vector<1x256xf32>
    %59 = vector.broadcast %58 : vector<1x256xf32> to vector<16x256xf32>
    %60 = vector.broadcast %cst_20 : f32 to vector<16x256xf32>
    %61 = arith.select %57, %59, %60 : vector<16x256xi1>, vector<16x256xf32>
    %62 = arith.addf %53, %61 : vector<16x256xf32>
    %63 = vector.shape_cast %45 : vector<16x256xf32> to vector<16x1x256xf32>
    %64 = vector.shape_cast %62 : vector<16x256xf32> to vector<1x16x256xf32>
    %65 = vector.broadcast %63 : vector<16x1x256xf32> to vector<16x16x256xf32>
    %66 = vector.broadcast %64 : vector<1x16x256xf32> to vector<16x16x256xf32>
    %67 = arith.mulf %65, %66 : vector<16x16x256xf32>
    %68 = vector.shape_cast %67 : vector<16x16x256xf32> to vector<256x256xf32>
    %c0_21 = arith.constant 0 : index
    %c0_22 = arith.constant 0 : index
    %c0_23 = arith.constant 0 : index
    %69 = vector.load %arg5[%c0_21, %c0_22, %c0_23] : memref<1x4x256xf32, #tpu.memory_space<vmem>>, vector<1x4x256xf32>
    %70 = vector.shape_cast %69 : vector<1x4x256xf32> to vector<4x256xf32>
    %71 = arith.truncf %70 : vector<4x256xf32> to vector<4x256xbf16>
    %72 = arith.truncf %68 : vector<256x256xf32> to vector<256x256xbf16>
    %cst_24 = arith.constant dense<0.000000e+00> : vector<4x256xf32>
    %73 = tpu.matmul %71, %72, %cst_24 {dimension_numbers = #tpu.dot_dimension_numbers<[1], [0], [0], [1], [0, 0, 1, 1], [], []>} : vector<4x256xbf16>, vector<256x256xbf16>, vector<4x256xf32> -> vector<4x256xf32>
    %cst_25 = arith.constant 0.000000e+00 : f32
    %cst_26 = arith.constant 1.000000e+00 : f32
    %74 = vector.broadcast %cst_25 : f32 to vector<4x256xf32>
    %75 = arith.maximumf %74, %73 : vector<4x256xf32>
    %76 = vector.broadcast %cst_26 : f32 to vector<4x256xf32>
    %77 = arith.minimumf %76, %75 : vector<4x256xf32>
    %c0_27 = arith.constant 0 : index
    %c0_28 = arith.constant 0 : index
    %c0_29 = arith.constant 0 : index
    %78 = vector.load %arg6[%c0_27, %c0_28, %c0_29] : memref<1x4x256xf32, #tpu.memory_space<vmem>>, vector<1x4x256xf32>
    %79 = vector.shape_cast %78 : vector<1x4x256xf32> to vector<4x256xf32>
    %80 = vector.shape_cast %77 : vector<4x256xf32> to vector<1x4x256xf32>
    tpu.vector_store %arg6[%c0_27, %c0_28, %c0_29], %80 {strides = array<i32>} : memref<1x4x256xf32, #tpu.memory_space<vmem>>, vector<1x4x256xf32>,
    return
  }
  func.func @transform_0(%arg0: i32) -> (i32, i32, i32) {
    %c0_i32 = arith.constant 0 : i32
    %c0_i32_0 = arith.constant 0 : i32
    %c0_i32_1 = arith.constant 0 : i32
    return %arg0, %c0_i32, %c0_i32_0 : i32, i32, i32
  }
  func.func @transform_1(%arg0: i32) -> (i32, i32) {
    %c0_i32 = arith.constant 0 : i32
    %c0_i32_0 = arith.constant 0 : i32
    %c0_i32_1 = arith.constant 0 : i32
    return %c0_i32, %c0_i32_0 : i32, i32
  }
  func.func @transform_2(%arg0: i32) -> (i32, i32) {
    %c0_i32 = arith.constant 0 : i32
    %c0_i32_0 = arith.constant 0 : i32
    %c0_i32_1 = arith.constant 0 : i32
    return %c0_i32, %c0_i32_0 : i32, i32
  }
  func.func @transform_3(%arg0: i32) -> (i32, i32) {
    %c0_i32 = arith.constant 0 : i32
    %c0_i32_0 = arith.constant 0 : i32
    %c0_i32_1 = arith.constant 0 : i32
    return %c0_i32, %c0_i32_0 : i32, i32
  }
  func.func @transform_4(%arg0: i32) -> (i32, i32, i32) {
    %c0_i32 = arith.constant 0 : i32
    %c0_i32_0 = arith.constant 0 : i32
    %c0_i32_1 = arith.constant 0 : i32
    return %arg0, %c0_i32, %c0_i32_0 : i32, i32, i32
  }
  func.func @transform_5(%arg0: i32) -> (i32, i32, i32) {
    %c0_i32 = arith.constant 0 : i32
    %c0_i32_0 = arith.constant 0 : i32
    %c0_i32_1 = arith.constant 0 : i32
    return %arg0, %c0_i32, %c0_i32_0 : i32, i32, i32
  }
}

</mosaic_0001>

<llo_original>
// kernel: spatial_uv_offset_transformer.1
$region0: #{spatial_uv_offset_transformer.1}
  #allocation0 [shape = 'u32[]', space=smem, size = 0x4, offset = 0x4, fixed_abs, tag = 'smem constant byte address 0x4 - core index']
  #allocation1 [shape = 'u32[144,128]{1,0:T(1,128)}', space=vmem, size = 0x12000, scoped, tag = 'internal scratch']
  %s0 = inlined_call_operand.vmem [shape: f32[2,1,32], index: 0, kind: input, shape index: {}]
  %s1 = inlined_call_operand.vmem [shape: f32[32,128], index: 1, kind: input, shape index: {}]
  %s2 = inlined_call_operand.vmem [shape: f32[2,128], index: 2, kind: input, shape index: {}]
  %s3 = inlined_call_operand.hbm [shape: f32[128,512], index: 3, kind: input, shape index: {}]
  %s4 = inlined_call_operand.vmem [shape: f32[2,4,256], index: 4, kind: input, shape index: {}]
  %s5 = inlined_call_operand.vmem [shape: f32[2,4,256], index: 5, kind: output, shape index: {}]
  %s6 = sld [smem:[#allocation0]]
  $region57: #{spatial_uv_offset_transformer.1} parent=0
    _
  %s8 = ssub.s32 1, %s6
  %s9 = scalar_select 0, %s8, %s6
  $region1: #{spatial_uv_offset_transformer.1} parent=0
    #allocation2 [shape = 'u8[262144]{0}', space=vmem, size = 0x40000, scoped, tag = 'input window, operand 3, single buffered']
    #allocation3 [shape = 's32[2]{0}', space=sflag, size = 0x8, scoped, tag = 'scoped memory for spatial_uv_offset_transformer.1']
    %10 = vsyncpa [#allocation3], 0
    loop: start=0, step=1, limit=4
    $region2: #{spatial_uv_offset_transformer.1} parent=1 // loop_pre_header
      _
    $region3: #{spatial_uv_offset_transformer.1} parent=1 // loop_header
      %s12 = sphi 0, %s16
      %p13 = scmp.ge.s32.totalorder %s12, 4
      %s22 = sphi 0, %s24
      %s25 = sphi 0, %s22
      %s26 = sphi 0, %s25
      %s42 = sphi 0, %s26
      %s46 = sphi 0, %s46
      %s48 = sphi 0, %s46
      %s49 = sphi 0, %s48
      %s63 = sphi 0, %s49
      %s67 = sphi 0, %s67
      %s69 = sphi 0, %s67
      %s70 = sphi 0, %s69
      %s84 = sphi 0, %s70
      %s88 = sphi 0, %s88
      %s90 = sphi 0, %s88
      %s91 = sphi 0, %s90
      %s105 = sphi 0, %s91
      %s111 = sphi 0, %s113
      %s114 = sphi 0, %s111
      %s115 = sphi 0, %s114
      %s131 = sphi 0, %s115
      %s137 = sphi 0, %s139
      %s140 = sphi 0, %s137
      %s141 = sphi 0, %s140
      %s157 = sphi 0, %s141
    $region4: #{spatial_uv_offset_transformer.1} parent=1 // loop_header_branch
      %15 = sbr.rel (%p13) target = $region8
    $region5: #{spatial_uv_offset_transformer.1} parent=1 // loop_body
      %s17 = ssub.s32 %s12, 1
      %s18 = ssub.s32 %s12, 2
      %s19 = sadd.s32 %s12, 1
      %s20 = ssub.s32 %s12, %s19
      %p21 = scmp.eq.s32.totalorder %s20, 0
      %s23 = sadd.s32 %s22, 1
      %s24 = scalar_select %p21, %s22, %s23
      %p27 = pneg %p21
      %p28 = scmp.eq.s32.totalorder %s12, 1
      %p29 = por %p27, %p28
      %p30 = scmp.ne.s32.totalorder %s22, %s25
      %p31 = scmp.eq.s32.totalorder %s12, 0
      %p32 = por %p30, %p31
      %p33 = scmp.ne.s32.totalorder %s22, %s25
      %p34 = scmp.eq.s32.totalorder %s17, 1
      %p35 = por %p33, %p34
      %p36 = scmp.ne.s32.totalorder %s25, %s26
      %p37 = scmp.eq.s32.totalorder %s17, 0
      %p38 = por %p36, %p37
      %p39 = scmp.ne.s32.totalorder %s25, %s26
      %p40 = scmp.eq.s32.totalorder %s18, 1
      %p41 = por %p39, %p40
      %p43 = scmp.ne.s32.totalorder %s26, %s42
      %p44 = scmp.eq.s32.totalorder %s18, 0
      %p45 = por %p43, %p44
      %s47 = sadd.s32 %s46, 1
      %p50 = scmp.eq.s32.totalorder %s12, 1
      %p51 = scmp.ne.s32.totalorder %s46, %s48
      %p52 = scmp.eq.s32.totalorder %s12, 0
      %p53 = por %p51, %p52
      %p54 = scmp.ne.s32.totalorder %s46, %s48
      %p55 = scmp.eq.s32.totalorder %s17, 1
      %p56 = por %p54, %p55
      %p57 = scmp.ne.s32.totalorder %s48, %s49
      %p58 = scmp.eq.s32.totalorder %s17, 0
      %p59 = por %p57, %p58
      %p60 = scmp.ne.s32.totalorder %s48, %s49
      %p61 = scmp.eq.s32.totalorder %s18, 1
      %p62 = por %p60, %p61
      %p64 = scmp.ne.s32.totalorder %s49, %s63
      %p65 = scmp.eq.s32.totalorder %s18, 0
      %p66 = por %p64, %p65
      %s68 = sadd.s32 %s67, 1
      %p71 = scmp.eq.s32.totalorder %s12, 1
      %p72 = scmp.ne.s32.totalorder %s67, %s69
      %p73 = scmp.eq.s32.totalorder %s12, 0
      %p74 = por %p72, %p73
      %p75 = scmp.ne.s32.totalorder %s67, %s69
      %p76 = scmp.eq.s32.totalorder %s17, 1
      %p77 = por %p75, %p76
      %p78 = scmp.ne.s32.totalorder %s69, %s70
      %p79 = scmp.eq.s32.totalorder %s17, 0
      %p80 = por %p78, %p79
      %p81 = scmp.ne.s32.totalorder %s69, %s70
      %p82 = scmp.eq.s32.totalorder %s18, 1
      %p83 = por %p81, %p82
      %p85 = scmp.ne.s32.totalorder %s70, %s84
      %p86 = scmp.eq.s32.totalorder %s18, 0
      %p87 = por %p85, %p86
      %s89 = sadd.s32 %s88, 1
      %p92 = scmp.eq.s32.totalorder %s12, 1
      %p93 = scmp.ne.s32.totalorder %s88, %s90
      %p94 = scmp.eq.s32.totalorder %s12, 0
      %p95 = por %p93, %p94
      %p96 = scmp.ne.s32.totalorder %s88, %s90
      %p97 = scmp.eq.s32.totalorder %s17, 1
      %p98 = por %p96, %p97
      %p99 = scmp.ne.s32.totalorder %s90, %s91
      %p100 = scmp.eq.s32.totalorder %s17, 0
      %p101 = por %p99, %p100
      %p102 = scmp.ne.s32.totalorder %s90, %s91
      %p103 = scmp.eq.s32.totalorder %s18, 1
      %p104 = por %p102, %p103
      %p106 = scmp.ne.s32.totalorder %s91, %s105
      %p107 = scmp.eq.s32.totalorder %s18, 0
      %p108 = por %p106, %p107
      %s109 = ssub.s32 %s12, %s19
      %p110 = scmp.eq.s32.totalorder %s109, 0
      %s112 = sadd.s32 %s111, 1
      %s113 = scalar_select %p110, %s111, %s112
      %p116 = pneg %p110
      %p117 = scmp.eq.s32.totalorder %s12, 1
      %p118 = por %p116, %p117
      %p119 = scmp.ne.s32.totalorder %s111, %s114
      %p120 = scmp.eq.s32.totalorder %s12, 0
      %p121 = por %p119, %p120
      %p122 = scmp.ne.s32.totalorder %s111, %s114
      %p123 = scmp.eq.s32.totalorder %s17, 1
      %p124 = por %p122, %p123
      %p125 = scmp.ne.s32.totalorder %s114, %s115
      %p126 = scmp.eq.s32.totalorder %s17, 0
      %p127 = por %p125, %p126
      %p128 = scmp.ne.s32.totalorder %s114, %s115
      %p129 = scmp.eq.s32.totalorder %s18, 1
      %p130 = por %p128, %p129
      %p132 = scmp.ne.s32.totalorder %s115, %s131
      %p133 = scmp.eq.s32.totalorder %s18, 0
      %p134 = por %p132, %p133
      %s135 = ssub.s32 %s12, %s19
      %p136 = scmp.eq.s32.totalorder %s135, 0
      %s138 = sadd.s32 %s137, 1
      %s139 = scalar_select %p136, %s137, %s138
      %p142 = pneg %p136
      %p143 = scmp.eq.s32.totalorder %s12, 1
      %p144 = por %p142, %p143
      %p145 = scmp.ne.s32.totalorder %s137, %s140
      %p146 = scmp.eq.s32.totalorder %s12, 0
      %p147 = por %p145, %p146
      %p148 = scmp.ne.s32.totalorder %s137, %s140
      %p149 = scmp.eq.s32.totalorder %s17, 1
      %p150 = por %p148, %p149
      %p151 = scmp.ne.s32.totalorder %s140, %s141
      %p152 = scmp.eq.s32.totalorder %s17, 0
      %p153 = por %p151, %p152
      %p154 = scmp.ne.s32.totalorder %s140, %s141
      %p155 = scmp.eq.s32.totalorder %s18, 1
      %p156 = por %p154, %p155
      %p158 = scmp.ne.s32.totalorder %s141, %s157
      %p159 = scmp.eq.s32.totalorder %s18, 0
      %p160 = por %p158, %p159
      %p161 = scmp.le.s32.totalorder 1, %s12
      %p162 = scmp.lt.s32.totalorder %s12, 3
      %p163 = pnand %p161, %p162
      %p164 = pneg %p163
      // Predicated region
      $region9: #{spatial_uv_offset_transformer.1} parent=5 // pred_check
        _
      $region10: #{spatial_uv_offset_transformer.1} parent=5 // pred_check_branch
        %166 = sbr.rel (%p163) target = $region12
      $region11: #{spatial_uv_offset_transformer.1} parent=5 // pred_region
        %s167 = ssub.s32 %s12, 1
        // Predicated region
        $region13: #{spatial_uv_offset_transformer.1} parent=11 // pred_check
          %p168 = pneg %p59
        $region14: #{spatial_uv_offset_transformer.1} parent=11 // pred_check_branch
          %170 = sbr.rel (%p168) target = $region16
        $region15: #{spatial_uv_offset_transformer.1} parent=11 // pred_region
          _
        $region16: #{spatial_uv_offset_transformer.1} parent=11 // pred_fallthru
          _
        // Predicated region
        $region17: #{spatial_uv_offset_transformer.1} parent=11 // pred_check
          %p171 = pneg %p80
        $region18: #{spatial_uv_offset_transformer.1} parent=11 // pred_check_branch
          %173 = sbr.rel (%p171) target = $region20
        $region19: #{spatial_uv_offset_transformer.1} parent=11 // pred_region
          _
        $region20: #{spatial_uv_offset_transformer.1} parent=11 // pred_fallthru
          _
        // Predicated region
        $region21: #{spatial_uv_offset_transformer.1} parent=11 // pred_check
          %p174 = pneg %p101
        $region22: #{spatial_uv_offset_transformer.1} parent=11 // pred_check_branch
          %176 = sbr.rel (%p174) target = $region24
        $region23: #{spatial_uv_offset_transformer.1} parent=11 // pred_region
          %s178 = ssub.s32 8192, 8192
          %179 = vsyncadd [#allocation3], %s178
          %s180 = sshll.u32 [#allocation2], 4
          %s181 = int_to_ptr.vmem [resolvable:$true] %s180
          %186 = dma.hbm_to_vmem [thread:$0]  %s3, 8192, %s181, [#allocation3], 512, 512, 32
        $region24: #{spatial_uv_offset_transformer.1} parent=11 // pred_fallthru
          _
      $region12: #{spatial_uv_offset_transformer.1} parent=5 // pred_fallthru
        _
      %p187 = scmp.lt.s32.totalorder %s12, 2
      // Predicated region
      $region25: #{spatial_uv_offset_transformer.1} parent=5 // pred_check
        %p188 = pneg %p187
      $region26: #{spatial_uv_offset_transformer.1} parent=5 // pred_check_branch
        %190 = sbr.rel (%p188) target = $region28
      $region27: #{spatial_uv_offset_transformer.1} parent=5 // pred_region
        // Predicated region
        $region29: #{spatial_uv_offset_transformer.1} parent=27 // pred_check
          %p191 = pneg %p32
        $region30: #{spatial_uv_offset_transformer.1} parent=27 // pred_check_branch
          %193 = sbr.rel (%p191) target = $region32
        $region31: #{spatial_uv_offset_transformer.1} parent=27 // pred_region
          %p194 = scmp.lt.s32.totalorder %s12, 1
          %s195 = scalar_select %p194, %s12, 1
          %s196 = scalar_lea.vmem %s0, %s195
        $region32: #{spatial_uv_offset_transformer.1} parent=27 // pred_fallthru
          _
        // Predicated region
        $region33: #{spatial_uv_offset_transformer.1} parent=27 // pred_check
          %p197 = pneg %p121
        $region34: #{spatial_uv_offset_transformer.1} parent=27 // pred_check_branch
          %199 = sbr.rel (%p197) target = $region36
        $region35: #{spatial_uv_offset_transformer.1} parent=27 // pred_region
          %p200 = scmp.lt.s32.totalorder %s12, 1
          %s201 = scalar_select %p200, %s12, 1
          %s202 = smul.addr %s201, 2
          %s203 = smul.addr %s202, 4
          %s204 = scalar_lea.vmem %s4, %s203
        $region36: #{spatial_uv_offset_transformer.1} parent=27 // pred_fallthru
          _
      $region28: #{spatial_uv_offset_transformer.1} parent=5 // pred_fallthru
        _
      %p205 = scmp.le.s32.totalorder 1, %s12
      %p206 = scmp.lt.s32.totalorder %s12, 3
      %p207 = pnand %p205, %p206
      %p208 = pneg %p207
      // Predicated region
      $region37: #{spatial_uv_offset_transformer.1} parent=5 // pred_check
        _
      $region38: #{spatial_uv_offset_transformer.1} parent=5 // pred_check_branch
        %210 = sbr.rel (%p207) target = $region40
      $region39: #{spatial_uv_offset_transformer.1} parent=5 // pred_region
        %s211 = ssub.s32 %s12, 1
        // Predicated region
        $region41: #{spatial_uv_offset_transformer.1} parent=39 // pred_check
          %p212 = pneg %p101
        $region42: #{spatial_uv_offset_transformer.1} parent=39 // pred_check_branch
          %214 = sbr.rel (%p212) target = $region44
        $region43: #{spatial_uv_offset_transformer.1} parent=39 // pred_region
          %215 = dma.done [#allocation3], 8192
        $region44: #{spatial_uv_offset_transformer.1} parent=39 // pred_fallthru
          _
        %p216 = scmp.lt.s32.totalorder %s17, 1
        %s217 = scalar_select %p216, %s17, 1
        %s218 = scalar_lea.vmem %s0, %s217
        %p219 = pneg %p38
        %p220 = pneg %p35
        %p221 = pneg %p59
        %p222 = pneg %p56
        %p223 = pneg %p80
        %p224 = pneg %p77
        %p225 = pneg %p101
        %p226 = pneg %p98
        %p227 = scmp.lt.s32.totalorder %s17, 1
        %s228 = scalar_select %p227, %s17, 1
        %s229 = smul.addr %s228, 2
        %s230 = smul.addr %s229, 4
        %s231 = scalar_lea.vmem %s4, %s230
        %p232 = pneg %p127
        %p233 = pneg %p124
        %p234 = pneg %p153
        %p235 = pneg %p150
        %p236 = scmp.lt.s32.totalorder %s17, 1
        %s237 = scalar_select %p236, %s17, 1
        %s238 = smul.addr %s237, 2
        %s239 = smul.addr %s238, 4
        %s240 = scalar_lea.vmem %s5, %s239
        %p241 = scmp.lt.s32.totalorder %s17, 1
        %s242 = scalar_select %p241, %s17, 1
        %s243 = scalar_lea.vmem %s0, %s242
        %p244 = scmp.lt.s32.totalorder %s17, 1
        %s245 = scalar_select %p244, %s17, 1
        %s246 = smul.addr %s245, 2
        %s247 = smul.addr %s246, 4
        %s248 = scalar_lea.vmem %s4, %s247
        %p249 = scmp.lt.s32.totalorder %s17, 1
        %s250 = scalar_select %p249, %s17, 1
        %s251 = smul.addr %s250, 2
        %s252 = smul.addr %s251, 4
        %s253 = scalar_lea.vmem %s5, %s252
        %v254 = vld [vmem:[%s243] sm:$0x1]
        %v255 = vld [vmem:[%s1] sm:$0xff]
        %v256 = vld [vmem:[%s1 + $0x8] sm:$0xff]
        %v257 = vld [vmem:[%s1 + $0x10] sm:$0xff]
        %v258 = vld [vmem:[%s1 + $0x18] sm:$0xff]
        %v259 = vld [vmem:[%s2] sm:$0x1]
        %vm260 = vcmask 261120
        %v262 = vsel %vm260, %v254, 0
        %264 = vmatprep.subr.mxu0 0.0
        %265 = vmatpush1.msra.mxu0 0.0
        %266 = vmatprep.subr.mxu0 0.0
        %267 = vmatpush1.msra.mxu0 0.0
        %268 = vmatprep.subr.mxu0 0.0
        %269 = vmatpush1.msra.mxu0 0.0
        %270 = vmatprep.subr.mxu0 0.0
        %271 = vmatpush1.msra.mxu0 0.0
        %272 = vmatprep.subr.mxu0 0.0
        %273 = vmatpush1.msra.mxu0 0.0
        %274 = vmatprep.subr.mxu0 0.0
        %275 = vmatpush1.msra.mxu0 0.0
        %276 = vmatprep.subr.mxu0 0.0
        %277 = vmatpush1.msra.mxu0 0.0
        %278 = vmatprep.subr.mxu0 0.0
        %279 = vmatpush1.msra.mxu0 0.0
        %280 = vmatprep.subr.mxu0 0.0
        %281 = vmatpush1.msra.mxu0 0.0
        %282 = vmatprep.subr.mxu0 0.0
        %283 = vmatpush1.msra.mxu0 0.0
        %284 = vmatprep.subr.mxu0 0.0
        %285 = vmatpush1.msra.mxu0 0.0
        %286 = vmatprep.subr.mxu0 0.0
        %287 = vmatpush1.msra.mxu0 0.0
        %288 = vmatprep.subr.mxu0 0.0
        %289 = vmatpush1.msra.mxu0 %v258
        %290 = vmatprep.subr.mxu0 0.0
        %291 = vmatpush1.msra.mxu0 %v257
        %292 = vmatprep.subr.mxu0 0.0
        %293 = vmatpush1.msra.mxu0 %v256
        %294 = vmatprep.subr.mxu0 0.0
        %295 = vmatpush1.msra.mxu0 %v255
        %296 = vmatprep.subr.mxu0 0.0
        %297 = vmatpush2.msra.mxu0 0.0
        %298 = vmatprep.subr.mxu0 0.0
        %299 = vmatpush2.msra.mxu0 0.0
        %300 = vmatprep.subr.mxu0 0.0
        %301 = vmatpush2.msra.mxu0 0.0
        %302 = vmatprep.subr.mxu0 0.0
        %303 = vmatpush2.msra.mxu0 0.0
        %304 = vmatprep.subr.mxu0 0.0
        %305 = vmatpush2.msra.mxu0 0.0
        %306 = vmatprep.subr.mxu0 0.0
        %307 = vmatpush2.msra.mxu0 0.0
        %308 = vmatprep.subr.mxu0 0.0
        %309 = vmatpush2.msra.mxu0 0.0
        %310 = vmatprep.subr.mxu0 0.0
        %311 = vmatpush2.msra.mxu0 0.0
        %312 = vmatprep.subr.mxu0 0.0
        %313 = vmatpush2.msra.mxu0 0.0
        %314 = vmatprep.subr.mxu0 0.0
        %315 = vmatpush2.msra.mxu0 0.0
        %316 = vmatprep.subr.mxu0 0.0
        %317 = vmatpush2.msra.mxu0 0.0
        %318 = vmatprep.subr.mxu0 0.0
        %319 = vmatpush2.msra.mxu0 0.0
        %320 = vmatprep.subr.mxu0 0.0
        %321 = vmatpush2.msra.mxu0 0.0
        %322 = vmatprep.subr.mxu0 0.0
        %323 = vmatpush2.msra.mxu0 0.0
        %324 = vmatprep.subr.mxu0 0.0
        %325 = vmatpush2.msra.mxu0 0.0
        %326 = vmatprep.subr.mxu0 0.0
        %327 = vmatpush2.msra.mxu0 0.0
        %328 = vmatprep.mubr.f32.mxu0 0.0
        %329 = vmatmul.mubr.f32.gmra.mxu0 %v262
        %v330 = vpop.f32.mrf.mxu0
        %v331 = vadd.f32 %v259, %v330
        %v332 = vpop.f32.mrf.mxu0
        %333 = vdwg.mxu0
        %v334 = vtanh.pop %v331
        %v335 = vld [vmem:[%s2 + $0x1] sm:$0x1]
        %v336 = vadd.f32 %v334, %v335
        %v337 = vld [vmem:[#allocation2] sm:$0xff]
        %v338 = vld [vmem:[#allocation2 + $0x8] sm:$0xff]
        %v339 = vld [vmem:[#allocation2 + $0x10] sm:$0xff]
        %v340 = vld [vmem:[#allocation2 + $0x18] sm:$0xff]
        %v341 = vld [vmem:[#allocation2 + $0x20] sm:$0xff]
        %v342 = vld [vmem:[#allocation2 + $0x28] sm:$0xff]
        %v343 = vld [vmem:[#allocation2 + $0x30] sm:$0xff]
        %v344 = vld [vmem:[#allocation2 + $0x38] sm:$0xff]
        %v345 = vld [vmem:[#allocation2 + $0x40] sm:$0xff]
        %v346 = vld [vmem:[#allocation2 + $0x48] sm:$0xff]
        %v347 = vld [vmem:[#allocation2 + $0x50] sm:$0xff]
        %v348 = vld [vmem:[#allocation2 + $0x58] sm:$0xff]
        %v349 = vld [vmem:[#allocation2 + $0x60] sm:$0xff]
        %v350 = vld [vmem:[#allocation2 + $0x68] sm:$0xff]
        %v351 = vld [vmem:[#allocation2 + $0x70] sm:$0xff]
        %v352 = vld [vmem:[#allocation2 + $0x78] sm:$0xff]
        %v353 = vld [vmem:[#allocation2 + $0x80] sm:$0xff]
        %v354 = vld [vmem:[#allocation2 + $0x88] sm:$0xff]
        %v355 = vld [vmem:[#allocation2 + $0x90] sm:$0xff]
        %v356 = vld [vmem:[#allocation2 + $0x98] sm:$0xff]
        %v357 = vld [vmem:[#allocation2 + $0xa0] sm:$0xff]
        %v358 = vld [vmem:[#allocation2 + $0xa8] sm:$0xff]
        %v359 = vld [vmem:[#allocation2 + $0xb0] sm:$0xff]
        %v360 = vld [vmem:[#allocation2 + $0xb8] sm:$0xff]
        %v361 = vld [vmem:[#allocation2 + $0xc0] sm:$0xff]
        %v362 = vld [vmem:[#allocation2 + $0xc8] sm:$0xff]
        %v363 = vld [vmem:[#allocation2 + $0xd0] sm:$0xff]
        %v364 = vld [vmem:[#allocation2 + $0xd8] sm:$0xff]
        %v365 = vld [vmem:[#allocation2 + $0xe0] sm:$0xff]
        %v366 = vld [vmem:[#allocation2 + $0xe8] sm:$0xff]
        %v367 = vld [vmem:[#allocation2 + $0xf0] sm:$0xff]
        %v368 = vld [vmem:[#allocation2 + $0xf8] sm:$0xff]
        %v369 = vld [vmem:[#allocation2 + $0x100] sm:$0xff]
        %v370 = vld [vmem:[#allocation2 + $0x108] sm:$0xff]
        %v371 = vld [vmem:[#allocation2 + $0x110] sm:$0xff]
        %v372 = vld [vmem:[#allocation2 + $0x118] sm:$0xff]
        %v373 = vld [vmem:[#allocation2 + $0x120] sm:$0xff]
        %v374 = vld [vmem:[#allocation2 + $0x128] sm:$0xff]
        %v375 = vld [vmem:[#allocation2 + $0x130] sm:$0xff]
        %v376 = vld [vmem:[#allocation2 + $0x138] sm:$0xff]
        %v377 = vld [vmem:[#allocation2 + $0x140] sm:$0xff]
        %v378 = vld [vmem:[#allocation2 + $0x148] sm:$0xff]
        %v379 = vld [vmem:[#allocation2 + $0x150] sm:$0xff]
        %v380 = vld [vmem:[#allocation2 + $0x158] sm:$0xff]
        %v381 = vld [vmem:[#allocation2 + $0x160] sm:$0xff]
        %v382 = vld [vmem:[#allocation2 + $0x168] sm:$0xff]
        %v383 = vld [vmem:[#allocation2 + $0x170] sm:$0xff]
        %v384 = vld [vmem:[#allocation2 + $0x178] sm:$0xff]
        %v385 = vld [vmem:[#allocation2 + $0x180] sm:$0xff]
        %v386 = vld [vmem:[#allocation2 + $0x188] sm:$0xff]
        %v387 = vld [vmem:[#allocation2 + $0x190] sm:$0xff]
        %v388 = vld [vmem:[#allocation2 + $0x198] sm:$0xff]
        %v389 = vld [vmem:[#allocation2 + $0x1a0] sm:$0xff]
        %v390 = vld [vmem:[#allocation2 + $0x1a8] sm:$0xff]
        %v391 = vld [vmem:[#allocation2 + $0x1b0] sm:$0xff]
        %v392 = vld [vmem:[#allocation2 + $0x1b8] sm:$0xff]
        %v393 = vld [vmem:[#allocation2 + $0x1c0] sm:$0xff]
        %v394 = vld [vmem:[#allocation2 + $0x1c8] sm:$0xff]
        %v395 = vld [vmem:[#allocation2 + $0x1d0] sm:$0xff]
        %v396 = vld [vmem:[#allocation2 + $0x1d8] sm:$0xff]
        %v397 = vld [vmem:[#allocation2 + $0x1e0] sm:$0xff]
        %v398 = vld [vmem:[#allocation2 + $0x1e8] sm:$0xff]
        %v399 = vld [vmem:[#allocation2 + $0x1f0] sm:$0xff]
        %v400 = vld [vmem:[#allocation2 + $0x1f8] sm:$0xff]
        %401 = vmatprep.subr.mxu0 %v398
        %402 = vmatpush1.msra.mxu0 %v397
        %403 = vmatprep.subr.mxu0 %v394
        %404 = vmatpush1.msra.mxu0 %v393
        %405 = vmatprep.subr.mxu0 %v390
        %406 = vmatpush1.msra.mxu0 %v389
        %407 = vmatprep.subr.mxu0 %v386
        %408 = vmatpush1.msra.mxu0 %v385
        %409 = vmatprep.subr.mxu0 %v382
        %410 = vmatpush1.msra.mxu0 %v381
        %411 = vmatprep.subr.mxu0 %v378
        %412 = vmatpush1.msra.mxu0 %v377
        %413 = vmatprep.subr.mxu0 %v374
        %414 = vmatpush1.msra.mxu0 %v373
        %415 = vmatprep.subr.mxu0 %v370
        %416 = vmatpush1.msra.mxu0 %v369
        %417 = vmatprep.subr.mxu0 %v366
        %418 = vmatpush1.msra.mxu0 %v365
        %419 = vmatprep.subr.mxu0 %v362
        %420 = vmatpush1.msra.mxu0 %v361
        %421 = vmatprep.subr.mxu0 %v358
        %422 = vmatpush1.msra.mxu0 %v357
        %423 = vmatprep.subr.mxu0 %v354
        %424 = vmatpush1.msra.mxu0 %v353
        %425 = vmatprep.subr.mxu0 %v350
        %426 = vmatpush1.msra.mxu0 %v349
        %427 = vmatprep.subr.mxu0 %v346
        %428 = vmatpush1.msra.mxu0 %v345
        %429 = vmatprep.subr.mxu0 %v342
        %430 = vmatpush1.msra.mxu0 %v341
        %431 = vmatprep.subr.mxu0 %v338
        %432 = vmatpush1.msra.mxu0 %v337
        %433 = vmatprep.subr.mxu0 0.0
        %434 = vmatpush2.msra.mxu0 0.0
        %435 = vmatprep.subr.mxu0 0.0
        %436 = vmatpush2.msra.mxu0 0.0
        %437 = vmatprep.subr.mxu0 0.0
        %438 = vmatpush2.msra.mxu0 0.0
        %439 = vmatprep.subr.mxu0 0.0
        %440 = vmatpush2.msra.mxu0 0.0
        %441 = vmatprep.subr.mxu0 0.0
        %442 = vmatpush2.msra.mxu0 0.0
        %443 = vmatprep.subr.mxu0 0.0
        %444 = vmatpush2.msra.mxu0 0.0
        %445 = vmatprep.subr.mxu0 0.0
        %446 = vmatpush2.msra.mxu0 0.0
        %447 = vmatprep.subr.mxu0 0.0
        %448 = vmatpush2.msra.mxu0 0.0
        %449 = vmatprep.subr.mxu0 0.0
        %450 = vmatpush2.msra.mxu0 0.0
        %451 = vmatprep.subr.mxu0 0.0
        %452 = vmatpush2.msra.mxu0 0.0
        %453 = vmatprep.subr.mxu0 0.0
        %454 = vmatpush2.msra.mxu0 0.0
        %455 = vmatprep.subr.mxu0 0.0
        %456 = vmatpush2.msra.mxu0 0.0
        %457 = vmatprep.subr.mxu0 0.0
        %458 = vmatpush2.msra.mxu0 0.0
        %459 = vmatprep.subr.mxu0 0.0
        %460 = vmatpush2.msra.mxu0 0.0
        %461 = vmatprep.subr.mxu0 0.0
        %462 = vmatpush2.msra.mxu0 0.0
        %463 = vmatprep.subr.mxu0 0.0
        %464 = vmatpush2.msra.mxu0 0.0
        %465 = vmatprep.mubr.f32.mxu0 0.0
        %466 = vmatmul.mubr.f32.gmra.mxu0 %v336
        %v467 = vpop.f32.mrf.mxu0
        %v468 = vadd.f32 0.0, %v467
        %v469 = vpop.f32.mrf.mxu0
        %v470 = vadd.f32 0.0, %v469
        %471 = vdwg.mxu0
        %472 = vmatprep.subr.mxu0 %v400
        %473 = vmatpush1.msra.mxu0 %v399
        %474 = vmatprep.subr.mxu0 %v396
        %475 = vmatpush1.msra.mxu0 %v395
        %476 = vmatprep.subr.mxu0 %v392
        %477 = vmatpush1.msra.mxu0 %v391
        %478 = vmatprep.subr.mxu0 %v388
        %479 = vmatpush1.msra.mxu0 %v387
        %480 = vmatprep.subr.mxu0 %v384
        %481 = vmatpush1.msra.mxu0 %v383
        %482 = vmatprep.subr.mxu0 %v380
        %483 = vmatpush1.msra.mxu0 %v379
        %484 = vmatprep.subr.mxu0 %v376
        %485 = vmatpush1.msra.mxu0 %v375
        %486 = vmatprep.subr.mxu0 %v372
        %487 = vmatpush1.msra.mxu0 %v371
        %488 = vmatprep.subr.mxu0 %v368
        %489 = vmatpush1.msra.mxu0 %v367
        %490 = vmatprep.subr.mxu0 %v364
        %491 = vmatpush1.msra.mxu0 %v363
        %492 = vmatprep.subr.mxu0 %v360
        %493 = vmatpush1.msra.mxu0 %v359
        %494 = vmatprep.subr.mxu0 %v356
        %495 = vmatpush1.msra.mxu0 %v355
        %496 = vmatprep.subr.mxu0 %v352
        %497 = vmatpush1.msra.mxu0 %v351
        %498 = vmatprep.subr.mxu0 %v348
        %499 = vmatpush1.msra.mxu0 %v347
        %500 = vmatprep.subr.mxu0 %v344
        %501 = vmatpush1.msra.mxu0 %v343
        %502 = vmatprep.subr.mxu0 %v340
        %503 = vmatpush1.msra.mxu0 %v339
        %504 = vmatprep.subr.mxu0 0.0
        %505 = vmatpush2.msra.mxu0 0.0
        %506 = vmatprep.subr.mxu0 0.0
        %507 = vmatpush2.msra.mxu0 0.0
        %508 = vmatprep.subr.mxu0 0.0
        %509 = vmatpush2.msra.mxu0 0.0
        %510 = vmatprep.subr.mxu0 0.0
        %511 = vmatpush2.msra.mxu0 0.0
        %512 = vmatprep.subr.mxu0 0.0
        %513 = vmatpush2.msra.mxu0 0.0
        %514 = vmatprep.subr.mxu0 0.0
        %515 = vmatpush2.msra.mxu0 0.0
        %516 = vmatprep.subr.mxu0 0.0
        %517 = vmatpush2.msra.mxu0 0.0
        %518 = vmatprep.subr.mxu0 0.0
        %519 = vmatpush2.msra.mxu0 0.0
        %520 = vmatprep.subr.mxu0 0.0
        %521 = vmatpush2.msra.mxu0 0.0
        %522 = vmatprep.subr.mxu0 0.0
        %523 = vmatpush2.msra.mxu0 0.0
        %524 = vmatprep.subr.mxu0 0.0
        %525 = vmatpush2.msra.mxu0 0.0
        %526 = vmatprep.subr.mxu0 0.0
        %527 = vmatpush2.msra.mxu0 0.0
        %528 = vmatprep.subr.mxu0 0.0
        %529 = vmatpush2.msra.mxu0 0.0
        %530 = vmatprep.subr.mxu0 0.0
        %531 = vmatpush2.msra.mxu0 0.0
        %532 = vmatprep.subr.mxu0 0.0
        %533 = vmatpush2.msra.mxu0 0.0
        %534 = vmatprep.subr.mxu0 0.0
        %535 = vmatpush2.msra.mxu0 0.0
        %536 = vmatprep.mubr.f32.mxu0 0.0
        %537 = vmatmul.mubr.f32.gmra.mxu0 %v336
        %v538 = vpop.f32.mrf.mxu0
        %v539 = vadd.f32 0.0, %v538
        %v540 = vpop.f32.mrf.mxu0
        %v541 = vadd.f32 0.0, %v540
        %542 = vdwg.mxu0
        %v543 = vadd.f32 %v468, 1.0
        %v544 = vadd.f32 %v470, 1.0
        %v545 = vmul.f32 %v543, 7.5
        %v546 = vmul.f32 %v544, 7.5
        %v547 = vadd.f32 %v539, 1.0
        %v548 = vadd.f32 %v541, 1.0
        %v549 = vmul.f32 %v547, 7.5
        %v550 = vmul.f32 %v548, 7.5
        %v551 = vfloor.f32 %v545
        %v552 = vfloor.f32 %v546
        %v553 = vfloor.f32 %v549
        %v554 = vfloor.f32 %v550
        %v555 = vsub.f32 %v545, %v551
        %v556 = vsub.f32 %v546, %v552
        %v557 = vsub.f32 %v549, %v553
        %v558 = vsub.f32 %v550, %v554
        %v559 = vcvt.f32.s32.to.zero.pseudo %v551
        %v560 = vcvt.f32.s32.to.zero.pseudo %v552
        %v561 = vcvt.f32.s32.to.zero.pseudo %v553
        %v562 = vcvt.f32.s32.to.zero.pseudo %v554
        %v563 = vlaneseq
        %v564 = vshrl.u32 %v563, 7
        %v565 = vadd.s32 %v564, 8
        %v566 = vlaneseq
        %v567 = vshrl.u32 %v566, 7
        %v568 = vsub.s32 0, %v567
        %v569 = vrot.slane %v561, %v568
        %v570 = vlaneseq
        %v571 = vshrl.u32 %v570, 7
        %v572 = vsub.s32 0, %v571
        %v573 = vrot.slane %v562, %v572
        %vm574 = vcmp.eq.s32.totalorder %v564, %v569
        %vm575 = vcmp.eq.s32.totalorder %v564, %v573
        %vm576 = vcmp.eq.s32.totalorder %v565, %v569
        %vm577 = vcmp.eq.s32.totalorder %v565, %v573
        %v578 = vsub.f32 1.0, %v557
        %v579 = vsub.f32 1.0, %v558
        %v580 = vlaneseq
        %v581 = vshrl.u32 %v580, 7
        %v582 = vsub.s32 0, %v581
        %v583 = vrot.slane %v578, %v582
        %v584 = vlaneseq
        %v585 = vshrl.u32 %v584, 7
        %v586 = vsub.s32 0, %v585
        %v587 = vrot.slane %v579, %v586
        %v588 = vsel %vm574, %v583, 0.0
        %v589 = vsel %vm575, %v587, 0.0
        %v590 = vsel %vm576, %v583, 0.0
        %v591 = vsel %vm577, %v587, 0.0
        %v592 = vadd.s32 %v561, 1
        %v593 = vadd.s32 %v562, 1
        %v594 = vlaneseq
        %v595 = vshrl.u32 %v594, 7
        %v596 = vsub.s32 0, %v595
        %v597 = vrot.slane %v592, %v596
        %v598 = vlaneseq
        %v599 = vshrl.u32 %v598, 7
        %v600 = vsub.s32 0, %v599
        %v601 = vrot.slane %v593, %v600
        %vm602 = vcmp.eq.s32.totalorder %v564, %v597
        %vm603 = vcmp.eq.s32.totalorder %v564, %v601
        %vm604 = vcmp.eq.s32.totalorder %v565, %v597
        %vm605 = vcmp.eq.s32.totalorder %v565, %v601
        %v606 = vlaneseq
        %v607 = vshrl.u32 %v606, 7
        %v608 = vsub.s32 0, %v607
        %v609 = vrot.slane %v557, %v608
        %v610 = vlaneseq
        %v611 = vshrl.u32 %v610, 7
        %v612 = vsub.s32 0, %v611
        %v613 = vrot.slane %v558, %v612
        %v614 = vsel %vm602, %v609, 0.0
        %v615 = vsel %vm603, %v613, 0.0
        %v616 = vsel %vm604, %v609, 0.0
        %v617 = vsel %vm605, %v613, 0.0
        %v618 = vadd.f32 %v588, %v614
        %v619 = vadd.f32 %v589, %v615
        %v620 = vadd.f32 %v590, %v616
        %v621 = vadd.f32 %v591, %v617
        %v622 = vlaneseq
        %v623 = vshrl.u32 %v622, 7
        %v624 = vsub.s32 0, %v623
        %v625 = vrot.slane %v559, %v624
        %v626 = vlaneseq
        %v627 = vshrl.u32 %v626, 7
        %v628 = vsub.s32 0, %v627
        %v629 = vrot.slane %v560, %v628
        %vm630 = vcmp.eq.s32.totalorder %v564, %v625
        %vm631 = vcmp.eq.s32.totalorder %v564, %v629
        %vm632 = vcmp.eq.s32.totalorder %v565, %v625
        %vm633 = vcmp.eq.s32.totalorder %v565, %v629
        %v634 = vsub.f32 1.0, %v555
        %v635 = vsub.f32 1.0, %v556
        %v636 = vlaneseq
        %v637 = vshrl.u32 %v636, 7
        %v638 = vsub.s32 0, %v637
        %v639 = vrot.slane %v634, %v638
        %v640 = vlaneseq
        %v641 = vshrl.u32 %v640, 7
        %v642 = vsub.s32 0, %v641
        %v643 = vrot.slane %v635, %v642
        %v644 = vsel %vm630, %v639, 0.0
        %v645 = vsel %vm631, %v643, 0.0
        %v646 = vsel %vm632, %v639, 0.0
        %v647 = vsel %vm633, %v643, 0.0
        %v648 = vadd.s32 %v559, 1
        %v649 = vadd.s32 %v560, 1
        %v650 = vlaneseq
        %v651 = vshrl.u32 %v650, 7
        %v652 = vsub.s32 0, %v651
        %v653 = vrot.slane %v648, %v652
        %v654 = vlaneseq
        %v655 = vshrl.u32 %v654, 7
        %v656 = vsub.s32 0, %v655
        %v657 = vrot.slane %v649, %v656
        %vm658 = vcmp.eq.s32.totalorder %v564, %v653
        %vm659 = vcmp.eq.s32.totalorder %v564, %v657
        %vm660 = vcmp.eq.s32.totalorder %v565, %v653
        %vm661 = vcmp.eq.s32.totalorder %v565, %v657
        %v662 = vlaneseq
        %v663 = vshrl.u32 %v662, 7
        %v664 = vsub.s32 0, %v663
        %v665 = vrot.slane %v555, %v664
        %v666 = vlaneseq
        %v667 = vshrl.u32 %v666, 7
        %v668 = vsub.s32 0, %v667
        %v669 = vrot.slane %v556, %v668
        %v670 = vsel %vm658, %v665, 0.0
        %v671 = vsel %vm659, %v669, 0.0
        %v672 = vsel %vm660, %v665, 0.0
        %v673 = vsel %vm661, %v669, 0.0
        %v674 = vadd.f32 %v644, %v670
        %v675 = vadd.f32 %v645, %v671
        %v676 = vadd.f32 %v646, %v672
        %v677 = vadd.f32 %v647, %v673
        %v682 = vcombine.low %v618, %v619
        %v683 = vcombine.high %v618, %v619
        %v685 = vunpack.c.l.s4 1966171168
        %v686 = vunpack.c.0.s8 %v685
        %v687 = vlaneseq
        %v688 = vshrl.u32 %v687, 7
        %v689 = vsub.s32 %v686, %v688
        %v690 = vrot.slane %v682, %v689
        %v692 = vunpack.c.l.s4 1966171168
        %v693 = vunpack.c.0.s8 %v692
        %v694 = vlaneseq
        %v695 = vshrl.u32 %v694, 7
        %v696 = vsub.s32 %v693, %v695
        %v697 = vrot.slane %v683, %v696
        %v698 = vcombine.high %v690, %v690
        %v699 = vcombine.high %v697, %v697
        %v701 = vunpack.c.l.s4 1966171168
        %v702 = vunpack.c.0.s8 %v701
        %v703 = vlaneseq
        %v704 = vshrl.u32 %v703, 7
        %v705 = vsub.s32 %v702, %v704
        %v706 = vrot.slane %v690, %v705
        %v708 = vunpack.c.l.s4 1966171168
        %v709 = vunpack.c.0.s8 %v708
        %v710 = vlaneseq
        %v711 = vshrl.u32 %v710, 7
        %v712 = vsub.s32 %v709, %v711
        %v713 = vrot.slane %v697, %v712
        %v715 = vunpack.c.l.s4 1966171168
        %v716 = vunpack.c.0.s8 %v715
        %v717 = vlaneseq
        %v718 = vshrl.u32 %v717, 7
        %v719 = vsub.s32 %v716, %v718
        %v720 = vrot.slane %v698, %v719
        %v722 = vunpack.c.l.s4 1966171168
        %v723 = vunpack.c.0.s8 %v722
        %v724 = vlaneseq
        %v725 = vshrl.u32 %v724, 7
        %v726 = vsub.s32 %v723, %v725
        %v727 = vrot.slane %v699, %v726
        %v728 = vcombine.high %v706, %v706
        %v729 = vcombine.high %v713, %v713
        %v730 = vcombine.high %v720, %v720
        %v731 = vcombine.high %v727, %v727
        %v732 = vcombine.low %v620, %v621
        %v733 = vcombine.high %v620, %v621
        %v735 = vunpack.c.l.s4 1966171168
        %v736 = vunpack.c.0.s8 %v735
        %v737 = vlaneseq
        %v738 = vshrl.u32 %v737, 7
        %v739 = vsub.s32 %v736, %v738
        %v740 = vrot.slane %v732, %v739
        %v742 = vunpack.c.l.s4 1966171168
        %v743 = vunpack.c.0.s8 %v742
        %v744 = vlaneseq
        %v745 = vshrl.u32 %v744, 7
        %v746 = vsub.s32 %v743, %v745
        %v747 = vrot.slane %v733, %v746
        %v748 = vcombine.high %v740, %v740
        %v749 = vcombine.high %v747, %v747
        %v751 = vunpack.c.l.s4 1966171168
        %v752 = vunpack.c.0.s8 %v751
        %v753 = vlaneseq
        %v754 = vshrl.u32 %v753, 7
        %v755 = vsub.s32 %v752, %v754
        %v756 = vrot.slane %v740, %v755
        %v758 = vunpack.c.l.s4 1966171168
        %v759 = vunpack.c.0.s8 %v758
        %v760 = vlaneseq
        %v761 = vshrl.u32 %v760, 7
        %v762 = vsub.s32 %v759, %v761
        %v763 = vrot.slane %v747, %v762
        %v765 = vunpack.c.l.s4 1966171168
        %v766 = vunpack.c.0.s8 %v765
        %v767 = vlaneseq
        %v768 = vshrl.u32 %v767, 7
        %v769 = vsub.s32 %v766, %v768
        %v770 = vrot.slane %v748, %v769
        %v772 = vunpack.c.l.s4 1966171168
        %v773 = vunpack.c.0.s8 %v772
        %v774 = vlaneseq
        %v775 = vshrl.u32 %v774, 7
        %v776 = vsub.s32 %v773, %v775
        %v777 = vrot.slane %v749, %v776
        %v778 = vcombine.high %v756, %v756
        %v779 = vcombine.high %v763, %v763
        %v780 = vcombine.high %v770, %v770
        %v781 = vcombine.high %v777, %v777
        %v782 = vlaneseq
        %v783 = vshrl.u32 %v782, 7
        %v784 = vsub.s32 0, %v783
        %v785 = vrot.slane %v706, %v784
        %v786 = vlaneseq
        %v787 = vshrl.u32 %v786, 7
        %v788 = vsub.s32 1, %v787
        %v789 = vrot.slane %v706, %v788
        %v790 = vlaneseq
        %v791 = vshrl.u32 %v790, 7
        %v792 = vsub.s32 0, %v791
        %v793 = vrot.slane %v720, %v792
        %v794 = vlaneseq
        %v795 = vshrl.u32 %v794, 7
        %v796 = vsub.s32 1, %v795
        %v797 = vrot.slane %v720, %v796
        %v798 = vlaneseq
        %v799 = vshrl.u32 %v798, 7
        %v800 = vsub.s32 0, %v799
        %v801 = vrot.slane %v728, %v800
        %v802 = vlaneseq
        %v803 = vshrl.u32 %v802, 7
        %v804 = vsub.s32 1, %v803
        %v805 = vrot.slane %v728, %v804
        %v806 = vlaneseq
        %v807 = vshrl.u32 %v806, 7
        %v808 = vsub.s32 0, %v807
        %v809 = vrot.slane %v730, %v808
        %v810 = vlaneseq
        %v811 = vshrl.u32 %v810, 7
        %v812 = vsub.s32 1, %v811
        %v813 = vrot.slane %v730, %v812
        %v814 = vlaneseq
        %v815 = vshrl.u32 %v814, 7
        %v816 = vsub.s32 0, %v815
        %v817 = vrot.slane %v713, %v816
        %v818 = vlaneseq
        %v819 = vshrl.u32 %v818, 7
        %v820 = vsub.s32 1, %v819
        %v821 = vrot.slane %v713, %v820
        %v822 = vlaneseq
        %v823 = vshrl.u32 %v822, 7
        %v824 = vsub.s32 0, %v823
        %v825 = vrot.slane %v727, %v824
        %v826 = vlaneseq
        %v827 = vshrl.u32 %v826, 7
        %v828 = vsub.s32 1, %v827
        %v829 = vrot.slane %v727, %v828
        %v830 = vlaneseq
        %v831 = vshrl.u32 %v830, 7
        %v832 = vsub.s32 0, %v831
        %v833 = vrot.slane %v729, %v832
        %v834 = vlaneseq
        %v835 = vshrl.u32 %v834, 7
        %v836 = vsub.s32 1, %v835
        %v837 = vrot.slane %v729, %v836
        %v838 = vlaneseq
        %v839 = vshrl.u32 %v838, 7
        %v840 = vsub.s32 0, %v839
        %v841 = vrot.slane %v731, %v840
        %v842 = vlaneseq
        %v843 = vshrl.u32 %v842, 7
        %v844 = vsub.s32 1, %v843
        %v845 = vrot.slane %v731, %v844
        %v846 = vlaneseq
        %v847 = vshrl.u32 %v846, 7
        %v848 = vsub.s32 0, %v847
        %v849 = vrot.slane %v756, %v848
        %v850 = vlaneseq
        %v851 = vshrl.u32 %v850, 7
        %v852 = vsub.s32 1, %v851
        %v853 = vrot.slane %v756, %v852
        %v854 = vlaneseq
        %v855 = vshrl.u32 %v854, 7
        %v856 = vsub.s32 0, %v855
        %v857 = vrot.slane %v770, %v856
        %v858 = vlaneseq
        %v859 = vshrl.u32 %v858, 7
        %v860 = vsub.s32 1, %v859
        %v861 = vrot.slane %v770, %v860
        %v862 = vlaneseq
        %v863 = vshrl.u32 %v862, 7
        %v864 = vsub.s32 0, %v863
        %v865 = vrot.slane %v778, %v864
        %v866 = vlaneseq
        %v867 = vshrl.u32 %v866, 7
        %v868 = vsub.s32 1, %v867
        %v869 = vrot.slane %v778, %v868
        %v870 = vlaneseq
        %v871 = vshrl.u32 %v870, 7
        %v872 = vsub.s32 0, %v871
        %v873 = vrot.slane %v780, %v872
        %v874 = vlaneseq
        %v875 = vshrl.u32 %v874, 7
        %v876 = vsub.s32 1, %v875
        %v877 = vrot.slane %v780, %v876
        %v878 = vlaneseq
        %v879 = vshrl.u32 %v878, 7
        %v880 = vsub.s32 0, %v879
        %v881 = vrot.slane %v763, %v880
        %v882 = vlaneseq
        %v883 = vshrl.u32 %v882, 7
        %v884 = vsub.s32 1, %v883
        %v885 = vrot.slane %v763, %v884
        %v886 = vlaneseq
        %v887 = vshrl.u32 %v886, 7
        %v888 = vsub.s32 0, %v887
        %v889 = vrot.slane %v777, %v888
        %v890 = vlaneseq
        %v891 = vshrl.u32 %v890, 7
        %v892 = vsub.s32 1, %v891
        %v893 = vrot.slane %v777, %v892
        %v894 = vlaneseq
        %v895 = vshrl.u32 %v894, 7
        %v896 = vsub.s32 0, %v895
        %v897 = vrot.slane %v779, %v896
        %v898 = vlaneseq
        %v899 = vshrl.u32 %v898, 7
        %v900 = vsub.s32 1, %v899
        %v901 = vrot.slane %v779, %v900
        %v902 = vlaneseq
        %v903 = vshrl.u32 %v902, 7
        %v904 = vsub.s32 0, %v903
        %v905 = vrot.slane %v781, %v904
        %v906 = vlaneseq
        %v907 = vshrl.u32 %v906, 7
        %v908 = vsub.s32 1, %v907
        %v909 = vrot.slane %v781, %v908
        %v942 = vmul.f32 %v785, %v674
        %v943 = vmul.f32 %v789, %v675
        %v944 = vmul.f32 %v785, %v676
        %v945 = vmul.f32 %v789, %v677
        %v946 = vmul.f32 %v793, %v674
        %v947 = vmul.f32 %v797, %v675
        %v948 = vmul.f32 %v793, %v676
        %v949 = vmul.f32 %v797, %v677
        %v950 = vmul.f32 %v801, %v674
        %v951 = vmul.f32 %v805, %v675
        %v952 = vmul.f32 %v801, %v676
        %v953 = vmul.f32 %v805, %v677
        %v954 = vmul.f32 %v809, %v674
        %v955 = vmul.f32 %v813, %v675
        %v956 = vmul.f32 %v809, %v676
        %v957 = vmul.f32 %v813, %v677
        %v958 = vmul.f32 %v817, %v674
        %v959 = vmul.f32 %v821, %v675
        %v960 = vmul.f32 %v817, %v676
        %v961 = vmul.f32 %v821, %v677
        %v962 = vmul.f32 %v825, %v674
        %v963 = vmul.f32 %v829, %v675
        %v964 = vmul.f32 %v825, %v676
        %v965 = vmul.f32 %v829, %v677
        %v966 = vmul.f32 %v833, %v674
        %v967 = vmul.f32 %v837, %v675
        %v968 = vmul.f32 %v833, %v676
        %v969 = vmul.f32 %v837, %v677
        %v970 = vmul.f32 %v841, %v674
        %v971 = vmul.f32 %v845, %v675
        %v972 = vmul.f32 %v841, %v676
        %v973 = vmul.f32 %v845, %v677
        %v974 = vmul.f32 %v849, %v674
        %v975 = vmul.f32 %v853, %v675
        %v976 = vmul.f32 %v849, %v676
        %v977 = vmul.f32 %v853, %v677
        %v978 = vmul.f32 %v857, %v674
        %v979 = vmul.f32 %v861, %v675
        %v980 = vmul.f32 %v857, %v676
        %v981 = vmul.f32 %v861, %v677
        %v982 = vmul.f32 %v865, %v674
        %v983 = vmul.f32 %v869, %v675
        %v984 = vmul.f32 %v865, %v676
        %v985 = vmul.f32 %v869, %v677
        %v986 = vmul.f32 %v873, %v674
        %v987 = vmul.f32 %v877, %v675
        %v988 = vmul.f32 %v873, %v676
        %v989 = vmul.f32 %v877, %v677
        %v990 = vmul.f32 %v881, %v674
        %v991 = vmul.f32 %v885, %v675
        %v992 = vmul.f32 %v881, %v676
        %v993 = vmul.f32 %v885, %v677
        %v994 = vmul.f32 %v889, %v674
        %v995 = vmul.f32 %v893, %v675
        %v996 = vmul.f32 %v889, %v676
        %v997 = vmul.f32 %v893, %v677
        %v998 = vmul.f32 %v897, %v674
        %v999 = vmul.f32 %v901, %v675
        %v1000 = vmul.f32 %v897, %v676
        %v1001 = vmul.f32 %v901, %v677
        %v1002 = vmul.f32 %v905, %v674
        %v1003 = vmul.f32 %v909, %v675
        %v1004 = vmul.f32 %v905, %v676
        %v1005 = vmul.f32 %v909, %v677
        %v1006 = vld [vmem:[%s248] sm:$0xff]
        %v1008 = vcombine.high %v1006, %v1006
        %v1010 = vpack.c.bf16 %v1006, %v1006
        %v1011 = vpack.c.bf16 %v1008, %v1008
        %v1012 = vpack.c.bf16 %v944, %v942
        %v1013 = vpack.c.bf16 %v945, %v943
        %v1014 = vpack.c.bf16 %v948, %v946
        %v1015 = vpack.c.bf16 %v949, %v947
        %v1016 = vpack.c.bf16 %v952, %v950
        %v1017 = vpack.c.bf16 %v953, %v951
        %v1018 = vpack.c.bf16 %v956, %v954
        %v1019 = vpack.c.bf16 %v957, %v955
        %v1020 = vpack.c.bf16 %v960, %v958
        %v1021 = vpack.c.bf16 %v961, %v959
        %v1022 = vpack.c.bf16 %v964, %v962
        %v1023 = vpack.c.bf16 %v965, %v963
        %v1024 = vpack.c.bf16 %v968, %v966
        %v1025 = vpack.c.bf16 %v969, %v967
        %v1026 = vpack.c.bf16 %v972, %v970
        %v1027 = vpack.c.bf16 %v973, %v971
        %v1028 = vpack.c.bf16 %v976, %v974
        %v1029 = vpack.c.bf16 %v977, %v975
        %v1030 = vpack.c.bf16 %v980, %v978
        %v1031 = vpack.c.bf16 %v981, %v979
        %v1032 = vpack.c.bf16 %v984, %v982
        %v1033 = vpack.c.bf16 %v985, %v983
        %v1034 = vpack.c.bf16 %v988, %v986
        %v1035 = vpack.c.bf16 %v989, %v987
        %v1036 = vpack.c.bf16 %v992, %v990
        %v1037 = vpack.c.bf16 %v993, %v991
        %v1038 = vpack.c.bf16 %v996, %v994
        %v1039 = vpack.c.bf16 %v997, %v995
        %v1040 = vpack.c.bf16 %v1000, %v998
        %v1041 = vpack.c.bf16 %v1001, %v999
        %v1042 = vpack.c.bf16 %v1004, %v1002
        %v1043 = vpack.c.bf16 %v1005, %v1003
        %1044 = vmatprep.subr.bf16.mxu0 %v1027
        %1045 = vmatpush1.bf16.msra.mxu0 %v1026
        %1046 = vmatprep.subr.bf16.mxu0 %v1025
        %1047 = vmatpush1.bf16.msra.mxu0 %v1024
        %1048 = vmatprep.subr.bf16.mxu0 %v1023
        %1049 = vmatpush1.bf16.msra.mxu0 %v1022
        %1050 = vmatprep.subr.bf16.mxu0 %v1021
        %1051 = vmatpush1.bf16.msra.mxu0 %v1020
        %1052 = vmatprep.subr.bf16.mxu0 %v1019
        %1053 = vmatpush1.bf16.msra.mxu0 %v1018
        %1054 = vmatprep.subr.bf16.mxu0 %v1017
        %1055 = vmatpush1.bf16.msra.mxu0 %v1016
        %1056 = vmatprep.subr.bf16.mxu0 %v1015
        %1057 = vmatpush1.bf16.msra.mxu0 %v1014
        %1058 = vmatprep.subr.bf16.mxu0 %v1013
        %1059 = vmatpush1.bf16.msra.mxu0 %v1012
        %1060 = vmatprep.subr.bf16.mxu0 %v1043
        %1061 = vmatpush2.bf16.msra.mxu0 %v1042
        %1062 = vmatprep.subr.bf16.mxu0 %v1041
        %1063 = vmatpush2.bf16.msra.mxu0 %v1040
        %1064 = vmatprep.subr.bf16.mxu0 %v1039
        %1065 = vmatpush2.bf16.msra.mxu0 %v1038
        %1066 = vmatprep.subr.bf16.mxu0 %v1037
        %1067 = vmatpush2.bf16.msra.mxu0 %v1036
        %1068 = vmatprep.subr.bf16.mxu0 %v1035
        %1069 = vmatpush2.bf16.msra.mxu0 %v1034
        %1070 = vmatprep.subr.bf16.mxu0 %v1033
        %1071 = vmatpush2.bf16.msra.mxu0 %v1032
        %1072 = vmatprep.subr.bf16.mxu0 %v1031
        %1073 = vmatpush2.bf16.msra.mxu0 %v1030
        %1074 = vmatprep.subr.bf16.mxu0 %v1029
        %1075 = vmatpush2.bf16.msra.mxu0 %v1028
        %1076 = vmatprep.mubr.bf16.mxu0 %v1011
        %1077 = vmatmul.mubr.bf16.gmra.mxu0 %v1010
        %v1078 = vpop.f32.mrf.mxu0
        %v1079 = vadd.f32 0.0, %v1078
        %v1080 = vpop.f32.mrf.mxu0
        %v1081 = vadd.f32 0.0, %v1080
        %v1082 = vpop.f32.mrf.mxu0
        %v1083 = vpop.f32.mrf.mxu0
        %1084 = vdwg.mxu0
        %v1085 = vmax.f32 %v1079, 0.0
        %v1086 = vmax.f32 %v1081, 0.0
        %v1087 = vmin.f32 %v1085, 1.0
        %v1088 = vmin.f32 %v1086, 1.0
        %v1091 = vcombine.low %v1087, %v1088
        %1093 = vst [vmem:[%s253] sm:$0xff] %v1091
        %p1094 = scmp.lt.s32.totalorder %s17, 1
        %s1095 = scalar_select %p1094, %s17, 1
        %s1096 = smul.addr %s1095, 2
        %s1097 = smul.addr %s1096, 4
        %s1098 = scalar_lea.vmem %s5, %s1097
        // Predicated region
        $region45: #{spatial_uv_offset_transformer.1} parent=39 // pred_check
          %p1099 = pneg %p150
        $region46: #{spatial_uv_offset_transformer.1} parent=39 // pred_check_branch
          %1101 = sbr.rel (%p1099) target = $region48
        $region47: #{spatial_uv_offset_transformer.1} parent=39 // pred_region
          _
        $region48: #{spatial_uv_offset_transformer.1} parent=39 // pred_fallthru
          _
      $region40: #{spatial_uv_offset_transformer.1} parent=5 // pred_fallthru
        _
      %p1102 = scmp.le.s32.totalorder 2, %s12
      // Predicated region
      $region49: #{spatial_uv_offset_transformer.1} parent=5 // pred_check
        %p1103 = pneg %p1102
      $region50: #{spatial_uv_offset_transformer.1} parent=5 // pred_check_branch
        %1105 = sbr.rel (%p1103) target = $region52
      $region51: #{spatial_uv_offset_transformer.1} parent=5 // pred_region
        %s1106 = ssub.s32 %s12, 2
        // Predicated region
        $region53: #{spatial_uv_offset_transformer.1} parent=51 // pred_check
          %p1107 = pneg %p156
        $region54: #{spatial_uv_offset_transformer.1} parent=51 // pred_check_branch
          %1109 = sbr.rel (%p1107) target = $region56
        $region55: #{spatial_uv_offset_transformer.1} parent=51 // pred_region
          %p1110 = scmp.lt.s32.totalorder %s18, 1
          %s1111 = scalar_select %p1110, %s18, 1
          %s1112 = smul.addr %s1111, 2
          %s1113 = smul.addr %s1112, 4
          %s1114 = scalar_lea.vmem %s5, %s1113
        $region56: #{spatial_uv_offset_transformer.1} parent=51 // pred_fallthru
          _
      $region52: #{spatial_uv_offset_transformer.1} parent=5 // pred_fallthru
        _
    $region6: #{spatial_uv_offset_transformer.1} parent=1 // loop_footer
      %s16 = sadd.s32 1, %s12
    $region7: #{spatial_uv_offset_transformer.1} parent=1 // loop_footer_branch
      %11 = sbr.rel target = $region3
    $region8: #{spatial_uv_offset_transformer.1} parent=1 // loop_exit
      _
    %1115 = vsyncpa [#allocation3], 1
    %s1116 = scalar_lea.sflag [#allocation3], 1
    %1117 = vsyncpa %s1116, 1

</llo_original>
